<compile_context>
chip_gen: v5e
topology: v5e:2x2
jax: 0.10.0
libtpu: 0.0.40
codegen_flags: <defaults>
</compile_context>

<pallas_src>
import jax
import jax.numpy as jnp
from jax.experimental import pallas as pl
from jax.experimental.pallas import tpu as pltpu

LANE = 128


def _round_up(x, m):
    return (x + m - 1) // m * m


# ----------------------------- Pallas kernel --------------------------------
def decoder_kernel(enc_ref, eenc_ref, state0_ref, embg_ref, w_ref, misc_ref,
                   pred_ref, state_out_ref, state_sc):
    """One teacher-forced decode step per grid iteration (grid=(T,)).

    enc_ref       : (N, S, 2H) encoder states, batch-major     (resident)
    eenc_ref      : (N, S)     sum(enc*w_energy_enc)+b_energy  (resident)
    state0_ref    : (N, W)     [h0 | c0 | 0...] initial state  (resident)
    embg_ref      : (N, 4H)    per-step gathered emb@W_ih_emb + b_ih + b_hh
    w_ref         : (4H, W)    rows 0:2H = W_ih_ctx^T, 2H:3H = W_hh^T,
                               3H:4H = [W_out^T | 0]           (resident)
    misc_ref      : (8, W)     row0=[w_energy_h|0], row1=[b_out|0] (resident)
    pred_ref      : (N, W)     per-step prediction slab ([:, :V] valid)
    state_out_ref : (N, W)     final [h | c | 0...] (written on last step)
    state_sc      : (N, W)     VMEM scratch: recurrent state across steps
    """
    t = pl.program_id(0)
    n_steps = pl.num_programs(0)
    H = w_ref.shape[0] // 4

    @pl.when(t == 0)
    def _init():
        state_sc[...] = state0_ref[...]

    state = state_sc[...]                                   # (N, W)
    h0 = state[:, :H]
    c0 = state[:, H:2 * H]

    # --- attention energy: enc part precomputed (step-invariant); the h part
    # uses the full lane-dense state row against misc row 0 (zero beyond H),
    # so the product picks out exactly h0 . w_energy_h with no sliced reads.
    e_h = jnp.sum(state * misc_ref[0:1, :], axis=-1, keepdims=True)   # (N, 1)
    energy = jnp.maximum(eenc_ref[...] + e_h, 0.0)                    # (N, S)

    # --- softmax over the sequence (lane) axis -------------------------------
    m = jnp.max(energy, axis=-1, keepdims=True)
    p = jnp.exp(energy - m)
    attn = p * pl.reciprocal(jnp.sum(p, axis=-1, keepdims=True), approx=True)

    # --- context = einsum('ns,nsl->nl', attn, enc) ---------------------------
    # TODO(synk): at real sequence lengths move this onto the MXU (per-n
    # (1,S)@(S,2H)); at S=8 the VPU mul + sublane reduce is a wash.
    context = jnp.sum(attn[:, :, None] * enc_ref[...], axis=1)        # (N, 2H)

    # --- LSTM gates: two small MXU pushes, no VMEM round trip for the LHS ----
    gates = (jnp.dot(context, w_ref[:2 * H, :4 * H],
                     preferred_element_type=jnp.float32)
             + jnp.dot(h0, w_ref[2 * H:3 * H, :4 * H],
                       preferred_element_type=jnp.float32)
             + embg_ref[...])                                          # (N, 4H)

    # PyTorch gate order i, f, g, o.  Sigmoid as one EUP tanh per gate.
    def _sigmoid(x):
        return 0.5 * jnp.tanh(0.5 * x) + 0.5

    i_g = _sigmoid(gates[:, 0 * H:1 * H])
    f_g = _sigmoid(gates[:, 1 * H:2 * H])
    g_g = jnp.tanh(gates[:, 2 * H:3 * H])
    o_g = _sigmoid(gates[:, 3 * H:4 * H])

    c1 = f_g * c0 + i_g * g_g
    h1 = o_g * jnp.tanh(c1)

    # --- output projection against the full (zero-padded) lane-dense weight
    # block; one full-width unmasked store per step.
    pred_ref[...] = (jnp.dot(h1, w_ref[3 * H:, :],
                             preferred_element_type=jnp.float32)
                     + misc_ref[1:2, :])

    # Persist recurrent state for the next grid step.
    state_sc[:, :H] = h1
    state_sc[:, H:2 * H] = c1

    @pl.when(t == n_steps - 1)
    def _finalize():
        state_out_ref[...] = state_sc[...]


# ----------------------- one-time (hoisted) weight prep ----------------------
def prepare_decoder_params(params):
    """Pack/transposed weight slabs ONCE per decode session (outside the
    per-step / per-sequence path)."""
    V, E = params["embedding"].shape
    H = params["w_hh"].shape[1]
    twoH, fourH = 2 * H, 4 * H

    # One shared lane-dense slab width for weights / misc / state / preds.
    W = _round_up(max(fourH, twoH, V, LANE), LANE)

    w_ih = params["w_ih"]                                  # (4H, 2H+E)
    w_ih_ctx_t = jnp.transpose(w_ih[:, :twoH])             # (2H, 4H)
    w_ih_emb_t = jnp.transpose(w_ih[:, twoH:])             # (E, 4H)
    w_hh_t = jnp.transpose(params["w_hh"])                 # (H, 4H)
    b_lstm = params["b_ih"] + params["b_hh"]               # (4H,)

    # Embedding gather folded with the embedding->gate matmul and LSTM biases.
    emb_gate_table = params["embedding"] @ w_ih_emb_t + b_lstm[None, :]  # (V,4H)

    # Weight slab (4H, W): stacked gate weights + zero-padded output proj.
    # TODO(synk): at real vocab sizes keep W_out/b_out as separate bf16 inputs
    # and tile the projection over V with a grid axis (v7x 64 MiB VMEM).
    w_slab = jnp.zeros((fourH, W), jnp.float32)
    w_slab = w_slab.at[:twoH, :fourH].set(w_ih_ctx_t)
    w_slab = w_slab.at[twoH:3 * H, :fourH].set(w_hh_t)
    w_slab = w_slab.at[3 * H:, :V].set(jnp.transpose(params["w_out"]))

    # Misc slab: row0 = h-part of the energy weights, row1 = output bias.
    w_energy = params["w_energy"]                          # (1, 3H): [h | enc]
    misc = jnp.zeros((8, W), jnp.float32)
    misc = misc.at[0, :H].set(w_energy[0, :H])
    misc = misc.at[1, :V].set(params["b_out"])

    return {"emb_gate_table": emb_gate_table, "w_slab": w_slab, "misc": misc,
            "w_energy_enc": w_energy[0, H:], "b_energy": params["b_energy"][0],
            "H": H, "V": V, "E": E, "W": W}


def prepare_encoder(encoder_states, prep):
    """Per-source-sequence prep (hoisted out of the decode loop):
    (S,N,2H)->(N,S,2H) transpose and the decode-step-invariant attention
    energy term sum(enc * w_energy_enc) + b_energy."""
    enc_nsd = jnp.transpose(encoder_states, (1, 0, 2))                 # (N,S,2H)
    e_enc = (jnp.einsum('nsl,l->ns', enc_nsd, prep["w_energy_enc"])
             + prep["b_energy"])                                       # (N, S)
    return {"enc_nsd": enc_nsd, "e_enc": e_enc}


# ------------------------------ decode wrappers -------------------------------
def decoder_decode(tokens, enc_prep, hidden, cell, prep):
    """Teacher-forced T-step decode fused into ONE pallas_call.

    tokens: (T, N) int32; hidden/cell: (1, N, H).
    Returns (preds (T, N, V), hidden (1, N, H), cell (1, N, H)).
    """
    T, N = tokens.shape
    H, V, W = prep["H"], prep["V"], prep["W"]
    enc_nsd, e_enc = enc_prep["enc_nsd"], enc_prep["e_enc"]
    S = enc_nsd.shape[1]

    # Per-step embedding->gate rows, gathered once for the whole decode.
    # TODO(synk): dropout on the embedding omitted (inference-mode identity).
    emb_gates = jnp.take(prep["emb_gate_table"], tokens, axis=0)       # (T,N,4H)

    # Initial state packed into one lane-dense slab: [h0 | c0 | 0...].
    state0 = jnp.zeros((N, W), jnp.float32)
    state0 = state0.at[:, :H].set(hidden[0]).at[:, H:2 * H].set(cell[0])

    grid_spec = pltpu.PrefetchScalarGridSpec(
        num_scalar_prefetch=0,
        grid=(T,),
        in_specs=[
            pl.BlockSpec((N, S, 2 * H), lambda t: (0, 0, 0)),    # enc (resident)
            pl.BlockSpec((N, S), lambda t: (0, 0)),              # e_enc (resident)
            pl.BlockSpec((N, W), lambda t: (0, 0)),              # state0 (resident)
            pl.BlockSpec((None, N, 4 * H), lambda t: (t, 0, 0)),  # emb gates/step
            pl.BlockSpec((4 * H, W), lambda t: (0, 0)),           # weights (resident)
            pl.BlockSpec((8, W), lambda t: (0, 0)),               # misc (resident)
        ],
        out_specs=[
            pl.BlockSpec((None, N, W), lambda t: (t, 0, 0)),      # per-step preds
            pl.BlockSpec((N, W), lambda t: (0, 0)),               # final state
        ],
        scratch_shapes=[pltpu.VMEM((N, W), jnp.float32)],
    )

    preds, state = pl.pallas_call(
        decoder_kernel,
        out_shape=(jax.ShapeDtypeStruct((T, N, W), jnp.float32),
                   jax.ShapeDtypeStruct((N, W), jnp.float32)),
        grid_spec=grid_spec,
        compiler_params=pltpu.CompilerParams(
            dimension_semantics=("arbitrary",)),   # sequential recurrence over T
    )(enc_nsd, e_enc, state0, emb_gates, prep["w_slab"], prep["misc"])

    return preds[:, :, :V], state[:, :H][None], state[:, H:2 * H][None]


def decoder_step(tokens, enc_prep, hidden, cell, prep):
    """Single decode step == the PyTorch module's forward (T=1)."""
    preds, h1, c1 = decoder_decode(tokens[None], enc_prep, hidden, cell, prep)
    return preds[0], h1, c1


# --------------------------- pure-JAX reference -------------------------------
def decoder_reference(tokens, encoder_states, hidden, cell, params):
    S, N, twoH = encoder_states.shape
    H = hidden.shape[-1]
    embedded = jnp.take(params["embedding"], tokens, axis=0)[None]     # (1,N,E)
    h_rep = jnp.tile(hidden, (S, 1, 1))                                # (S,N,H)
    cat = jnp.concatenate([h_rep, encoder_states], axis=2)             # (S,N,3H)
    energy = jax.nn.relu(cat @ params["w_energy"].T + params["b_energy"])
    attn = jax.nn.softmax(energy, axis=0)
    context = jnp.einsum('snk,snl->knl', attn, encoder_states)         # (1,N,2H)
    x = jnp.concatenate([context, embedded], axis=2)[0]                # (N,2H+E)
    gates = x @ params["w_ih"].T + hidden[0] @ params["w_hh"].T \
        + params["b_ih"] + params["b_hh"]
    i_g = jax.nn.sigmoid(gates[:, 0 * H:1 * H])
    f_g = jax.nn.sigmoid(gates[:, 1 * H:2 * H])
    g_g = jnp.tanh(gates[:, 2 * H:3 * H])
    o_g = jax.nn.sigmoid(gates[:, 3 * H:4 * H])
    c1 = f_g * cell[0] + i_g * g_g
    h1 = o_g * jnp.tanh(c1)
    pred = h1 @ params["w_out"].T + params["b_out"]
    return pred, h1[None], c1[None]


# ---------------------------------- main --------------------------------------
if __name__ == "__main__":
    V = 32          # output_dim (vocab)
    E = 16          # embedding_dim
    H = 32          # hidden_dim
    N = 2           # batch
    S = 8           # encoder sequence length
    T = 4           # teacher-forced decode steps fused into one pallas_call
    # n_layers must be 1 for the module's forward to be shape-consistent.

    key = jax.random.PRNGKey(0)
    keys = jax.random.split(key, 16)

    params = {
        "embedding": jax.random.normal(keys[0], (V, E), jnp.float32) * 0.1,
        "w_energy":  jax.random.normal(keys[1], (1, 3 * H), jnp.float32) * 0.1,
        "b_energy":  jax.random.normal(keys[2], (1,), jnp.float32) * 0.1,
        "w_ih":      jax.random.normal(keys[3], (4 * H, 2 * H + E), jnp.float32) * 0.1,
        "w_hh":      jax.random.normal(keys[4], (4 * H, H), jnp.float32) * 0.1,
        "b_ih":      jax.random.normal(keys[5], (4 * H,), jnp.float32) * 0.1,
        "b_hh":      jax.random.normal(keys[6], (4 * H,), jnp.float32) * 0.1,
        "w_out":     jax.random.normal(keys[7], (V, H), jnp.float32) * 0.1,
        "b_out":     jax.random.normal(keys[8], (V,), jnp.float32) * 0.1,
    }

    tokens0 = jax.random.randint(keys[9], (N,), 0, V, jnp.int32)
    encoder_states = jax.random.normal(keys[10], (S, N, 2 * H), jnp.float32)
    hidden = jax.random.normal(keys[11], (1, N, H), jnp.float32)
    cell = jax.random.normal(keys[12], (1, N, H), jnp.float32)
    tokens_seq = jax.random.randint(keys[13], (T, N), 0, V, jnp.int32)

    # Hoisted once per session / per source sequence:
    prep = prepare_decoder_params(params)
    enc_prep = prepare_encoder(encoder_states, prep)

    # --- single step == the module's forward --------------------------------
    pred, h1, c1 = decoder_step(tokens0, enc_prep, hidden, cell, prep)
    jax.block_until_ready((pred, h1, c1))
    pred_r, h1_r, c1_r = decoder_reference(tokens0, encoder_states, hidden,
                                           cell, params)
    assert pred.shape == (N, V) and h1.shape == (1, N, H) and c1.shape == (1, N, H)
    # 1e-3 tolerance: pl.reciprocal(approx=True) in the softmax denominator
    # contributes ~2^-12 relative error; everything else is ~exact f32.
    assert jnp.allclose(pred, pred_r, atol=1e-3, rtol=1e-3)
    assert jnp.allclose(h1, h1_r, atol=1e-3, rtol=1e-3)
    assert jnp.allclose(c1, c1_r, atol=1e-3, rtol=1e-3)

    # --- T teacher-forced steps fused in a single pallas_call ----------------
    preds, hT, cT = decoder_decode(tokens_seq, enc_prep, hidden, cell, prep)
    jax.block_until_ready((preds, hT, cT))

    h_r, c_r, preds_r = hidden, cell, []
    for t in range(T):
        p_r, h_r, c_r = decoder_reference(tokens_seq[t], encoder_states,
                                          h_r, c_r, params)
        preds_r.append(p_r)
    preds_r = jnp.stack(preds_r)

    assert preds.shape == (T, N, V)
    assert jnp.allclose(preds, preds_r, atol=1e-3, rtol=1e-3)
    assert jnp.allclose(hT, h_r, atol=1e-3, rtol=1e-3)
    assert jnp.allclose(cT, c_r, atol=1e-3, rtol=1e-3)

    print("KERNEL_OK")
</pallas_src>

<mosaic_0001>
module attributes {stable_mosaic.version = 11 : i64} {
  func.func @decoder_kernel(%arg0: i32, %arg1: memref<2x8x64xf32, #tpu.memory_space<vmem>>, %arg2: memref<2x8xf32, #tpu.memory_space<vmem>>, %arg3: memref<2x128xf32, #tpu.memory_space<vmem>>, %arg4: memref<1x2x128xf32, #tpu.memory_space<vmem>>, %arg5: memref<128x128xf32, #tpu.memory_space<vmem>>, %arg6: memref<8x128xf32, #tpu.memory_space<vmem>>, %arg7: memref<1x2x128xf32, #tpu.memory_space<vmem>>, %arg8: memref<2x128xf32, #tpu.memory_space<vmem>>, %arg9: memref<2x128xf32, #tpu.memory_space<vmem>>) attributes {dimension_semantics = [#tpu.dimension_semantics<arbitrary>], iteration_bounds = array<i64: 1>, scalar_prefetch = 0 : i64, scratch_operands = 1 : i64, tpu.core_type = #tpu.core_type<tc>, window_params = [{pipeline_mode = #tpu.pipeline_mode<synchronous>, transform_indices = @transform_0, window_bounds = array<i64: 2, 8, 64>}, {pipeline_mode = #tpu.pipeline_mode<synchronous>, transform_indices = @transform_1, window_bounds = array<i64: 2, 8>}, {pipeline_mode = #tpu.pipeline_mode<synchronous>, transform_indices = @transform_2, window_bounds = array<i64: 2, 128>}, {transform_indices = @transform_3, window_bounds = array<i64: 1, 2, 128>}, {pipeline_mode = #tpu.pipeline_mode<synchronous>, transform_indices = @transform_4, window_bounds = array<i64: 128, 128>}, {pipeline_mode = #tpu.pipeline_mode<synchronous>, transform_indices = @transform_5, window_bounds = array<i64: 8, 128>}, {transform_indices = @transform_6, window_bounds = array<i64: 1, 2, 128>}, {pipeline_mode = #tpu.pipeline_mode<synchronous>, transform_indices = @transform_7, window_bounds = array<i64: 2, 128>}]} {
    %c0_i32 = arith.constant 0 : i32
    %0 = arith.cmpi eq, %arg0, %c0_i32 : i32
    %1 = arith.extui %0 : i1 to i32
    %c0_i32_0 = arith.constant 0 : i32
    %2 = arith.cmpi ne, %1, %c0_i32_0 : i32
    scf.if %2 {
      %c0_41 = arith.constant 0 : index
      %c0_42 = arith.constant 0 : index
      %83 = vector.load %arg3[%c0_41, %c0_42] : memref<2x128xf32, #tpu.memory_space<vmem>>, vector<2x128xf32>
      %c0_43 = arith.constant 0 : index
      %c0_44 = arith.constant 0 : index
      %84 = vector.load %arg9[%c0_43, %c0_44] : memref<2x128xf32, #tpu.memory_space<vmem>>, vector<2x128xf32>
      tpu.vector_store %arg9[%c0_43, %c0_44], %83 {strides = array<i32>} : memref<2x128xf32, #tpu.memory_space<vmem>>, vector<2x128xf32>,
    } else {
    }
    %c0 = arith.constant 0 : index
    %c0_1 = arith.constant 0 : index
    %3 = vector.load %arg9[%c0, %c0_1] : memref<2x128xf32, #tpu.memory_space<vmem>>, vector<2x128xf32>
    %4 = vector.extract_strided_slice %3 {offsets = [0, 0], sizes = [2, 32], strides = [1, 1]} : vector<2x128xf32> to vector<2x32xf32>
    %5 = vector.extract_strided_slice %3 {offsets = [0, 32], sizes = [2, 32], strides = [1, 1]} : vector<2x128xf32> to vector<2x32xf32>
    %c0_2 = arith.constant 0 : index
    %c0_3 = arith.constant 0 : index
    %6 = vector.load %arg6[%c0_2, %c0_3] : memref<8x128xf32, #tpu.memory_space<vmem>>, vector<1x128xf32>
    %7 = vector.broadcast %6 : vector<1x128xf32> to vector<2x128xf32>
    %8 = arith.mulf %3, %7 : vector<2x128xf32>
    %cst = arith.constant dense<0.000000e+00> : vector<2xf32>
    %9 = vector.multi_reduction <add>, %8, %cst [1] : vector<2x128xf32> to vector<2xf32>
    %10 = vector.shape_cast %9 : vector<2xf32> to vector<2x1xf32>
    %c0_4 = arith.constant 0 : index
    %c0_5 = arith.constant 0 : index
    %11 = vector.load %arg2[%c0_4, %c0_5] : memref<2x8xf32, #tpu.memory_space<vmem>>, vector<2x8xf32>
    %12 = vector.broadcast %10 : vector<2x1xf32> to vector<2x8xf32>
    %13 = arith.addf %11, %12 : vector<2x8xf32>
    %cst_6 = arith.constant 0.000000e+00 : f32
    %14 = vector.broadcast %cst_6 : f32 to vector<2x8xf32>
    %15 = arith.maximumf %13, %14 : vector<2x8xf32>
    %cst_7 = arith.constant dense<0xFF800000> : vector<2xf32>
    %16 = vector.multi_reduction <maximumf>, %15, %cst_7 [1] : vector<2x8xf32> to vector<2xf32>
    %17 = vector.shape_cast %16 : vector<2xf32> to vector<2x1xf32>
    %18 = vector.broadcast %17 : vector<2x1xf32> to vector<2x8xf32>
    %19 = arith.subf %15, %18 : vector<2x8xf32>
    %20 = math.exp %19 : vector<2x8xf32>
    %cst_8 = arith.constant dense<0.000000e+00> : vector<2xf32>
    %21 = vector.multi_reduction <add>, %20, %cst_8 [1] : vector<2x8xf32> to vector<2xf32>
    %22 = vector.shape_cast %21 : vector<2xf32> to vector<2x1xf32>
    %23 = tpu.reciprocal %22 {approx = true} : vector<2x1xf32> -> vector<2x1xf32>
    %24 = vector.broadcast %23 : vector<2x1xf32> to vector<2x8xf32>
    %25 = arith.mulf %20, %24 : vector<2x8xf32>
    %26 = vector.shape_cast %25 : vector<2x8xf32> to vector<2x8x1xf32>
    %c0_9 = arith.constant 0 : index
    %c0_10 = arith.constant 0 : index
    %c0_11 = arith.constant 0 : index
    %27 = vector.load %arg1[%c0_9, %c0_10, %c0_11] : memref<2x8x64xf32, #tpu.memory_space<vmem>>, vector<2x8x64xf32>
    %28 = vector.broadcast %26 : vector<2x8x1xf32> to vector<2x8x64xf32>
    %29 = arith.mulf %28, %27 : vector<2x8x64xf32>
    %cst_12 = arith.constant dense<0.000000e+00> : vector<2x64xf32>
    %30 = vector.multi_reduction <add>, %29, %cst_12 [1] : vector<2x8x64xf32> to vector<2x64xf32>
    %c0_13 = arith.constant 0 : index
    %c0_14 = arith.constant 0 : index
    %31 = vector.load %arg5[%c0_13, %c0_14] : memref<128x128xf32, #tpu.memory_space<vmem>>, vector<64x128xf32>
    %cst_15 = arith.constant dense<0.000000e+00> : vector<2x128xf32>
    %32 = tpu.matmul %30, %31, %cst_15 {dimension_numbers = #tpu.dot_dimension_numbers<[1], [0], [0], [1], [0, 0, 1, 1], [], []>} : vector<2x64xf32>, vector<64x128xf32>, vector<2x128xf32> -> vector<2x128xf32>
    %c64 = arith.constant 64 : index
    %c0_16 = arith.constant 0 : index
    %33 = vector.load %arg5[%c64, %c0_16] : memref<128x128xf32, #tpu.memory_space<vmem>>, vector<32x128xf32>
    %cst_17 = arith.constant dense<0.000000e+00> : vector<2x128xf32>
    %34 = tpu.matmul %4, %33, %cst_17 {dimension_numbers = #tpu.dot_dimension_numbers<[1], [0], [0], [1], [0, 0, 1, 1], [], []>} : vector<2x32xf32>, vector<32x128xf32>, vector<2x128xf32> -> vector<2x128xf32>
    %35 = arith.addf %32, %34 : vector<2x128xf32>
    %c0_18 = arith.constant 0 : index
    %c0_19 = arith.constant 0 : index
    %c0_20 = arith.constant 0 : index
    %36 = vector.load %arg4[%c0_18, %c0_19, %c0_20] : memref<1x2x128xf32, #tpu.memory_space<vmem>>, vector<1x2x128xf32>
    %37 = vector.shape_cast %36 : vector<1x2x128xf32> to vector<2x128xf32>
    %38 = arith.addf %35, %37 : vector<2x128xf32>
    %39 = vector.extract_strided_slice %38 {offsets = [0, 0], sizes = [2, 32], strides = [1, 1]} : vector<2x128xf32> to vector<2x32xf32>
    %cst_21 = arith.constant 5.000000e-01 : f32
    %40 = vector.broadcast %cst_21 : f32 to vector<2x32xf32>
    %41 = arith.mulf %40, %39 : vector<2x32xf32>
    %42 = math.tanh %41 : vector<2x32xf32>
    %cst_22 = arith.constant 5.000000e-01 : f32
    %43 = vector.broadcast %cst_22 : f32 to vector<2x32xf32>
    %44 = arith.mulf %43, %42 : vector<2x32xf32>
    %cst_23 = arith.constant 5.000000e-01 : f32
    %45 = vector.broadcast %cst_23 : f32 to vector<2x32xf32>
    %46 = arith.addf %44, %45 : vector<2x32xf32>
    %47 = vector.extract_strided_slice %38 {offsets = [0, 32], sizes = [2, 32], strides = [1, 1]} : vector<2x128xf32> to vector<2x32xf32>
    %cst_24 = arith.constant 5.000000e-01 : f32
    %48 = vector.broadcast %cst_24 : f32 to vector<2x32xf32>
    %49 = arith.mulf %48, %47 : vector<2x32xf32>
    %50 = math.tanh %49 : vector<2x32xf32>
    %cst_25 = arith.constant 5.000000e-01 : f32
    %51 = vector.broadcast %cst_25 : f32 to vector<2x32xf32>
    %52 = arith.mulf %51, %50 : vector<2x32xf32>
    %cst_26 = arith.constant 5.000000e-01 : f32
    %53 = vector.broadcast %cst_26 : f32 to vector<2x32xf32>
    %54 = arith.addf %52, %53 : vector<2x32xf32>
    %55 = vector.extract_strided_slice %38 {offsets = [0, 64], sizes = [2, 32], strides = [1, 1]} : vector<2x128xf32> to vector<2x32xf32>
    %56 = math.tanh %55 : vector<2x32xf32>
    %57 = vector.extract_strided_slice %38 {offsets = [0, 96], sizes = [2, 32], strides = [1, 1]} : vector<2x128xf32> to vector<2x32xf32>
    %cst_27 = arith.constant 5.000000e-01 : f32
    %58 = vector.broadcast %cst_27 : f32 to vector<2x32xf32>
    %59 = arith.mulf %58, %57 : vector<2x32xf32>
    %60 = math.tanh %59 : vector<2x32xf32>
    %cst_28 = arith.constant 5.000000e-01 : f32
    %61 = vector.broadcast %cst_28 : f32 to vector<2x32xf32>
    %62 = arith.mulf %61, %60 : vector<2x32xf32>
    %cst_29 = arith.constant 5.000000e-01 : f32
    %63 = vector.broadcast %cst_29 : f32 to vector<2x32xf32>
    %64 = arith.addf %62, %63 : vector<2x32xf32>
    %65 = arith.mulf %54, %5 : vector<2x32xf32>
    %66 = arith.mulf %46, %56 : vector<2x32xf32>
    %67 = arith.addf %65, %66 : vector<2x32xf32>
    %68 = math.tanh %67 : vector<2x32xf32>
    %69 = arith.mulf %64, %68 : vector<2x32xf32>
    %c96 = arith.constant 96 : index
    %c0_30 = arith.constant 0 : index
    %70 = vector.load %arg5[%c96, %c0_30] : memref<128x128xf32, #tpu.memory_space<vmem>>, vector<32x128xf32>
    %cst_31 = arith.constant dense<0.000000e+00> : vector<2x128xf32>
    %71 = tpu.matmul %69, %70, %cst_31 {dimension_numbers = #tpu.dot_dimension_numbers<[1], [0], [0], [1], [0, 0, 1, 1], [], []>} : vector<2x32xf32>, vector<32x128xf32>, vector<2x128xf32> -> vector<2x128xf32>
    %c1 = arith.constant 1 : index
    %c0_32 = arith.constant 0 : index
    %72 = vector.load %arg6[%c1, %c0_32] : memref<8x128xf32, #tpu.memory_space<vmem>>, vector<1x128xf32>
    %73 = vector.broadcast %72 : vector<1x128xf32> to vector<2x128xf32>
    %74 = arith.addf %71, %73 : vector<2x128xf32>
    %c0_33 = arith.constant 0 : index
    %c0_34 = arith.constant 0 : index
    %c0_35 = arith.constant 0 : index
    %75 = vector.load %arg7[%c0_33, %c0_34, %c0_35] : memref<1x2x128xf32, #tpu.memory_space<vmem>>, vector<1x2x128xf32>
    %76 = vector.shape_cast %75 : vector<1x2x128xf32> to vector<2x128xf32>
    %77 = vector.shape_cast %74 : vector<2x128xf32> to vector<1x2x128xf32>
    tpu.vector_store %arg7[%c0_33, %c0_34, %c0_35], %77 {strides = array<i32>} : memref<1x2x128xf32, #tpu.memory_space<vmem>>, vector<1x2x128xf32>,
    %c0_36 = arith.constant 0 : index
    %c0_37 = arith.constant 0 : index
    %78 = vector.load %arg9[%c0_36, %c0_37] : memref<2x128xf32, #tpu.memory_space<vmem>>, vector<2x32xf32>
    tpu.vector_store %arg9[%c0_36, %c0_37], %69 {strides = array<i32>} : memref<2x128xf32, #tpu.memory_space<vmem>>, vector<2x32xf32>,
    %c0_38 = arith.constant 0 : index
    %c32 = arith.constant 32 : index
    %79 = vector.load %arg9[%c0_38, %c32] : memref<2x128xf32, #tpu.memory_space<vmem>>, vector<2x32xf32>
    tpu.vector_store %arg9[%c0_38, %c32], %67 {strides = array<i32>} : memref<2x128xf32, #tpu.memory_space<vmem>>, vector<2x32xf32>,
    %c0_i32_39 = arith.constant 0 : i32
    %80 = arith.cmpi eq, %arg0, %c0_i32_39 : i32
    %81 = arith.extui %80 : i1 to i32
    %c0_i32_40 = arith.constant 0 : i32
    %82 = arith.cmpi ne, %81, %c0_i32_40 : i32
    scf.if %82 {
      %c0_41 = arith.constant 0 : index
      %c0_42 = arith.constant 0 : index
      %83 = vector.load %arg9[%c0_41, %c0_42] : memref<2x128xf32, #tpu.memory_space<vmem>>, vector<2x128xf32>
      %c0_43 = arith.constant 0 : index
      %c0_44 = arith.constant 0 : index
      %84 = vector.load %arg8[%c0_43, %c0_44] : memref<2x128xf32, #tpu.memory_space<vmem>>, vector<2x128xf32>
      tpu.vector_store %arg8[%c0_43, %c0_44], %83 {strides = array<i32>} : memref<2x128xf32, #tpu.memory_space<vmem>>, vector<2x128xf32>,
    } else {
    }
    return
  }
  func.func @transform_0(%arg0: i32) -> (i32, i32, i32) {
    %c0_i32 = arith.constant 0 : i32
    %c0_i32_0 = arith.constant 0 : i32
    %c0_i32_1 = arith.constant 0 : i32
    %c0_i32_2 = arith.constant 0 : i32
    return %c0_i32, %c0_i32_0, %c0_i32_1 : i32, i32, i32
  }
  func.func @transform_1(%arg0: i32) -> (i32, i32) {
    %c0_i32 = arith.constant 0 : i32
    %c0_i32_0 = arith.constant 0 : i32
    %c0_i32_1 = arith.constant 0 : i32
    return %c0_i32, %c0_i32_0 : i32, i32
  }
  func.func @transform_2(%arg0: i32) -> (i32, i32) {
    %c0_i32 = arith.constant 0 : i32
    %c0_i32_0 = arith.constant 0 : i32
    %c0_i32_1 = arith.constant 0 : i32
    return %c0_i32, %c0_i32_0 : i32, i32
  }
  func.func @transform_3(%arg0: i32) -> (i32, i32, i32) {
    %c0_i32 = arith.constant 0 : i32
    %c0_i32_0 = arith.constant 0 : i32
    %c0_i32_1 = arith.constant 0 : i32
    return %arg0, %c0_i32, %c0_i32_0 : i32, i32, i32
  }
  func.func @transform_4(%arg0: i32) -> (i32, i32) {
    %c0_i32 = arith.constant 0 : i32
    %c0_i32_0 = arith.constant 0 : i32
    %c0_i32_1 = arith.constant 0 : i32
    return %c0_i32, %c0_i32_0 : i32, i32
  }
  func.func @transform_5(%arg0: i32) -> (i32, i32) {
    %c0_i32 = arith.constant 0 : i32
    %c0_i32_0 = arith.constant 0 : i32
    %c0_i32_1 = arith.constant 0 : i32
    return %c0_i32, %c0_i32_0 : i32, i32
  }
  func.func @transform_6(%arg0: i32) -> (i32, i32, i32) {
    %c0_i32 = arith.constant 0 : i32
    %c0_i32_0 = arith.constant 0 : i32
    %c0_i32_1 = arith.constant 0 : i32
    return %arg0, %c0_i32, %c0_i32_0 : i32, i32, i32
  }
  func.func @transform_7(%arg0: i32) -> (i32, i32) {
    %c0_i32 = arith.constant 0 : i32
    %c0_i32_0 = arith.constant 0 : i32
    %c0_i32_1 = arith.constant 0 : i32
    return %c0_i32, %c0_i32_0 : i32, i32
  }
}

</mosaic_0001>

<llo_original>
// kernel: tpu_custom_call.1
$region0: #{tpu_custom_call.1}
  #allocation0 [shape = 'u32[]', space=smem, size = 0x4, offset = 0x4, fixed_abs, tag = 'smem constant byte address 0x4 - core index']
  #allocation1 [shape = 'u32[72,128]{1,0:T(1,128)}', space=vmem, size = 0x9000, scoped, tag = 'internal scratch']
  #allocation2 [shape = 'f32[2,128]{1,0:T(2,128)}', space=vmem, size = 0x400, scoped, tag = 'scratch operand']
  %s0 = inlined_call_operand.hbm [shape: f32[2,8,64], index: 0, kind: input, shape index: {}]
  %s1 = inlined_call_operand.hbm [shape: f32[2,8], index: 1, kind: input, shape index: {}]
  %s2 = inlined_call_operand.hbm [shape: f32[2,128], index: 2, kind: input, shape index: {}]
  %s3 = inlined_call_operand.vmem [shape: f32[1,2,128], index: 3, kind: input, shape index: {}]
  %s4 = inlined_call_operand.hbm [shape: f32[128,128], index: 4, kind: input, shape index: {}]
  %s5 = inlined_call_operand.hbm [shape: f32[8,128], index: 5, kind: input, shape index: {}]
  %s6 = inlined_call_operand.hbm [shape: f32[1,2,128], index: 6, kind: output, shape index: {0}]
  %s7 = inlined_call_operand.hbm [shape: f32[2,128], index: 7, kind: output, shape index: {1}]
  %8 = xla_tuple %s6, %s7
  %s9 = sld [smem:[#allocation0]]
  $region70: #{tpu_custom_call.1} parent=0
    _
  %s11 = ssub.s32 1, %s9
  %s12 = scalar_select 0, %s11, %s9
  $region1: #{tpu_custom_call.1} parent=0
    #allocation3 [shape = 'u8[8192]{0}', space=vmem, size = 0x2000, scoped, tag = 'input window, operand 0, single buffered']
    #allocation4 [shape = 's32[1]{0}', space=sflag, size = 0x4, scoped, tag = 'scoped memory for tpu_custom_call.1']
    #allocation5 [shape = 's32[1]{0}', space=sflag, size = 0x4, scoped, tag = 'scoped memory for tpu_custom_call.1']
    #allocation6 [shape = 'u8[1024]{0}', space=vmem, size = 0x400, scoped, tag = 'input window, operand 1, single buffered']
    #allocation7 [shape = 's32[1]{0}', space=sflag, size = 0x4, scoped, tag = 'scoped memory for tpu_custom_call.1']
    #allocation8 [shape = 'u8[1024]{0}', space=vmem, size = 0x400, scoped, tag = 'input window, operand 2, single buffered']
    #allocation9 [shape = 'u8[65536]{0}', space=vmem, size = 0x10000, scoped, tag = 'input window, operand 4, single buffered']
    #allocation10 [shape = 's32[1]{0}', space=sflag, size = 0x4, scoped, tag = 'scoped memory for tpu_custom_call.1']
    #allocation11 [shape = 'u8[4096]{0}', space=vmem, size = 0x1000, scoped, tag = 'input window, operand 5, single buffered']
    #allocation12 [shape = 'u8[1024]{0}', space=vmem, size = 0x400, scoped, tag = 'output window, operand 0, single buffered']
    #allocation13 [shape = 'u8[1024]{0}', space=vmem, size = 0x400, scoped, tag = 'output window, operand 1, single buffered']
    #allocation14 [shape = 's32[1]{0}', space=sflag, size = 0x4, scoped, tag = 'scoped memory for tpu_custom_call.1']
    %13 = vsyncpa [#allocation4], 0
    %14 = vsyncpa [#allocation7], 0
    %15 = vsyncpa [#allocation10], 0
    %16 = vsyncpa [#allocation5], 0
    %17 = vsyncpa [#allocation14], 0
    // Predicated region
    $region2: #{tpu_custom_call.1} parent=1 // pred_check
      _
    $region3: #{tpu_custom_call.1} parent=1 // pred_check_branch
      %19 = sbr.rel (0) target = $region5
    $region4: #{tpu_custom_call.1} parent=1 // pred_region
      %21 = vsyncadd [#allocation4], 0
      %s22 = sshll.u32 %s0, 4
      %s23 = int_to_ptr.hbm [resolvable:$true] %s22
      %s24 = sshll.u32 [#allocation3], 4
      %s25 = int_to_ptr.vmem [resolvable:$true] %s24
      %30 = dma.hbm_to_vmem [thread:$0]  %s23, 256, %s25, [#allocation4], 128, 128, 8
    $region5: #{tpu_custom_call.1} parent=1 // pred_fallthru
      _
    // Predicated region
    $region6: #{tpu_custom_call.1} parent=1 // pred_check
      _
    $region7: #{tpu_custom_call.1} parent=1 // pred_check_branch
      %32 = sbr.rel (0) target = $region9
    $region8: #{tpu_custom_call.1} parent=1 // pred_region
      %34 = vsyncadd [#allocation7], 0
      %s36 = sshll.u32 %s1, 4
      %s37 = int_to_ptr.hbm [resolvable:$true] %s36
      %s38 = sshll.u32 [#allocation6], 4
      %s39 = int_to_ptr.vmem [resolvable:$true] %s38
      %41 = dma.hbm_to_vmem [thread:$0]  %s37, 32, %s39, [#allocation7]
    $region9: #{tpu_custom_call.1} parent=1 // pred_fallthru
      _
    // Predicated region
    $region10: #{tpu_custom_call.1} parent=1 // pred_check
      _
    $region11: #{tpu_custom_call.1} parent=1 // pred_check_branch
      %43 = sbr.rel (0) target = $region13
    $region12: #{tpu_custom_call.1} parent=1 // pred_region
      %45 = vsyncadd [#allocation7], 0
      %s47 = sshll.u32 %s2, 4
      %s48 = int_to_ptr.hbm [resolvable:$true] %s47
      %s49 = sshll.u32 [#allocation8], 4
      %s50 = int_to_ptr.vmem [resolvable:$true] %s49
      %52 = dma.hbm_to_vmem [thread:$0]  %s48, 32, %s50, [#allocation7]
    $region13: #{tpu_custom_call.1} parent=1 // pred_fallthru
      _
    // Predicated region
    $region14: #{tpu_custom_call.1} parent=1 // pred_check
      _
    $region15: #{tpu_custom_call.1} parent=1 // pred_check_branch
      %54 = sbr.rel (0) target = $region17
    $region16: #{tpu_custom_call.1} parent=1 // pred_region
      _
    $region17: #{tpu_custom_call.1} parent=1 // pred_fallthru
      _
    // Predicated region
    $region18: #{tpu_custom_call.1} parent=1 // pred_check
      _
    $region19: #{tpu_custom_call.1} parent=1 // pred_check_branch
      %56 = sbr.rel (0) target = $region21
    $region20: #{tpu_custom_call.1} parent=1 // pred_region
      %58 = vsyncadd [#allocation10], 0
      %s59 = sshll.u32 %s4, 4
      %s60 = int_to_ptr.hbm [resolvable:$true] %s59
      %s61 = sshll.u32 [#allocation9], 4
      %s62 = int_to_ptr.vmem [resolvable:$true] %s61
      %67 = dma.hbm_to_vmem [thread:$0]  %s60, 2048, %s62, [#allocation10], 128, 128, 8
    $region21: #{tpu_custom_call.1} parent=1 // pred_fallthru
      _
    // Predicated region
    $region22: #{tpu_custom_call.1} parent=1 // pred_check
      _
    $region23: #{tpu_custom_call.1} parent=1 // pred_check_branch
      %69 = sbr.rel (0) target = $region25
    $region24: #{tpu_custom_call.1} parent=1 // pred_region
      %71 = vsyncadd [#allocation10], 0
      %s73 = sshll.u32 %s5, 4
      %s74 = int_to_ptr.hbm [resolvable:$true] %s73
      %s75 = sshll.u32 [#allocation11], 4
      %s76 = int_to_ptr.vmem [resolvable:$true] %s75
      %78 = dma.hbm_to_vmem [thread:$0]  %s74, 128, %s76, [#allocation10]
    $region25: #{tpu_custom_call.1} parent=1 // pred_fallthru
      _
    // Predicated region
    $region26: #{tpu_custom_call.1} parent=1 // pred_check
      _
    $region27: #{tpu_custom_call.1} parent=1 // pred_check_branch
      %80 = sbr.rel (0) target = $region29
    $region28: #{tpu_custom_call.1} parent=1 // pred_region
      %82 = dma.done [#allocation4], 256
    $region29: #{tpu_custom_call.1} parent=1 // pred_fallthru
      _
    // Predicated region
    $region30: #{tpu_custom_call.1} parent=1 // pred_check
      _
    $region31: #{tpu_custom_call.1} parent=1 // pred_check_branch
      %84 = sbr.rel (0) target = $region33
    $region32: #{tpu_custom_call.1} parent=1 // pred_region
      %86 = dma.done [#allocation7], 32
    $region33: #{tpu_custom_call.1} parent=1 // pred_fallthru
      _
    // Predicated region
    $region34: #{tpu_custom_call.1} parent=1 // pred_check
      _
    $region35: #{tpu_custom_call.1} parent=1 // pred_check_branch
      %88 = sbr.rel (0) target = $region37
    $region36: #{tpu_custom_call.1} parent=1 // pred_region
      %90 = dma.done [#allocation7], 32
    $region37: #{tpu_custom_call.1} parent=1 // pred_fallthru
      _
    // Predicated region
    $region38: #{tpu_custom_call.1} parent=1 // pred_check
      _
    $region39: #{tpu_custom_call.1} parent=1 // pred_check_branch
      %92 = sbr.rel (0) target = $region41
    $region40: #{tpu_custom_call.1} parent=1 // pred_region
      %94 = dma.done [#allocation10], 2048
    $region41: #{tpu_custom_call.1} parent=1 // pred_fallthru
      _
    // Predicated region
    $region42: #{tpu_custom_call.1} parent=1 // pred_check
      _
    $region43: #{tpu_custom_call.1} parent=1 // pred_check_branch
      %96 = sbr.rel (0) target = $region45
    $region44: #{tpu_custom_call.1} parent=1 // pred_region
      %98 = dma.done [#allocation10], 128
    $region45: #{tpu_custom_call.1} parent=1 // pred_fallthru
      _
    %p99 = scmp.eq.s32.totalorder 0, 0
    // Predicated region
    $region46: #{tpu_custom_call.1} parent=1 // pred_check
      %p100 = pneg %p99
    $region47: #{tpu_custom_call.1} parent=1 // pred_check_branch
      %102 = sbr.rel (%p100) target = $region49
    $region48: #{tpu_custom_call.1} parent=1 // pred_region
      %v103 = vld [vmem:[#allocation8] sm:$0x3]
      %104 = vst [vmem:[#allocation2] sm:$0x3] %v103
    $region49: #{tpu_custom_call.1} parent=1 // pred_fallthru
      _
    %v105 = vld [vmem:[#allocation2] sm:$0x3]
    %v106 = vld [vmem:[#allocation11] sm:$0x1]
    %v107 = vperm.slane %v106, 0
    %v108 = vmul.f32 %v105, %v107
    %vm109 = vcmask 1041408
    %v110 = vsel %vm109, %v108, 0.0
    %111 = vadd.xlane.f32.xlu0 %v110
    %v112 = vpop.xlane.xlu0 %111
    %v113 = vld [vmem:[#allocation6] sm:$0x3]
    %v114 = vadd.f32 %v113, %v112
    %v115 = vmax.f32 %v114, 0.0
    %vm116 = vcmask 58368
    %v117 = vsel %vm116, %v115, -inf
    %118 = vmax.xlane.f32.xlu0 %v117
    %v119 = vpop.xlane.xlu0 %118
    %v120 = vsub.f32 %v115, %v119
    %v121 = vmul.f32 %v120, 1.442695
    %v122 = vpow.pop %v121
    %v123 = vsel %vm116, %v122, 0.0
    %124 = vadd.xlane.f32.xlu0 %v123
    %v125 = vpop.xlane.xlu0 %124
    %v126 = vrcp.pop %v125
    %v127 = vmul.f32 %v122, %v126
    %v128 = vperm.slane %v127, 0
    %v129 = vlaneseq
    %v130 = vshrl.u32 %v129, 7
    %132 = vset.pattern.permute.xlu0 %v130
    %133 = vperm.xlu0 %132, %v128
    %v134 = vpop.permute.xlu0 %133
    %v135 = vperm.slane %v127, 1
    %v136 = vlaneseq
    %v137 = vshrl.u32 %v136, 7
    %139 = vset.pattern.permute.xlu0 %v137
    %140 = vperm.xlu0 %139, %v135
    %v141 = vpop.permute.xlu0 %140
    %v142 = vld [vmem:[#allocation3] sm:$0xff]
    %v143 = vld [vmem:[#allocation3 + $0x8] sm:$0xff]
    %v144 = vmul.f32 %v134, %v142
    %v145 = vmul.f32 %v141, %v143
    %vm146 = vcmask 523264
    %v147 = vsel %vm146, %v144, 0.0
    %v148 = vrot.slane %v147, 4
    %v149 = vadd.f32 %v147, %v148
    %v150 = vrot.slane %v149, 2
    %v151 = vadd.f32 %v149, %v150
    %v152 = vrot.slane %v151, 1
    %v153 = vadd.f32 %v151, %v152
    %v154 = vsel %vm146, %v145, 0.0
    %v155 = vrot.slane %v154, 4
    %v156 = vadd.f32 %v154, %v155
    %v157 = vrot.slane %v156, 2
    %v158 = vadd.f32 %v156, %v157
    %v159 = vrot.slane %v158, 1
    %v160 = vadd.f32 %v158, %v159
    %v161 = vld [vmem:[#allocation9] sm:$0xff]
    %v162 = vld [vmem:[#allocation9 + $0x8] sm:$0xff]
    %v163 = vld [vmem:[#allocation9 + $0x10] sm:$0xff]
    %v164 = vld [vmem:[#allocation9 + $0x18] sm:$0xff]
    %v165 = vld [vmem:[#allocation9 + $0x20] sm:$0xff]
    %v166 = vld [vmem:[#allocation9 + $0x28] sm:$0xff]
    %v167 = vld [vmem:[#allocation9 + $0x30] sm:$0xff]
    %v168 = vld [vmem:[#allocation9 + $0x38] sm:$0xff]
    %v169 = vld [vmem:[#allocation9 + $0x40] sm:$0xff]
    %v170 = vld [vmem:[#allocation9 + $0x48] sm:$0xff]
    %v171 = vld [vmem:[#allocation9 + $0x50] sm:$0xff]
    %v172 = vld [vmem:[#allocation9 + $0x58] sm:$0xff]
    %vm173 = vcmask 261120
    %v175 = vsel %vm173, %v105, 0
    %177 = vmatpush.msra.mxu0 0.0
    %178 = vmatpush.msra.mxu0 0.0
    %179 = vmatpush.msra.mxu0 0.0
    %180 = vmatpush.msra.mxu0 0.0
    %181 = vmatpush.msra.mxu0 0.0
    %182 = vmatpush.msra.mxu0 0.0
    %183 = vmatpush.msra.mxu0 0.0
    %184 = vmatpush.msra.mxu0 0.0
    %185 = vmatpush.msra.mxu0 0.0
    %186 = vmatpush.msra.mxu0 0.0
    %187 = vmatpush.msra.mxu0 0.0
    %188 = vmatpush.msra.mxu0 0.0
    %189 = vmatpush.msra.mxu0 %v172
    %190 = vmatpush.msra.mxu0 %v171
    %191 = vmatpush.msra.mxu0 %v170
    %192 = vmatpush.msra.mxu0 %v169
    %193 = vmatmul.f32.gmra.mxu0 %v175
    %v194 = vpop.f32.mrf.mxu0
    %v195 = vadd.f32 0.0, %v194
    %196 = vdwg.mxu0
    %vm199 = vcmask 1041409
    %v200 = vsel %vm199, %v160, %v153
    %v201 = vsel %vm146, %v200, 0
    %203 = vmatpush.msra.mxu0 0.0
    %204 = vmatpush.msra.mxu0 0.0
    %205 = vmatpush.msra.mxu0 0.0
    %206 = vmatpush.msra.mxu0 0.0
    %207 = vmatpush.msra.mxu0 0.0
    %208 = vmatpush.msra.mxu0 0.0
    %209 = vmatpush.msra.mxu0 0.0
    %210 = vmatpush.msra.mxu0 0.0
    %211 = vmatpush.msra.mxu0 %v168
    %212 = vmatpush.msra.mxu0 %v167
    %213 = vmatpush.msra.mxu0 %v166
    %214 = vmatpush.msra.mxu0 %v165
    %215 = vmatpush.msra.mxu0 %v164
    %216 = vmatpush.msra.mxu0 %v163
    %217 = vmatpush.msra.mxu0 %v162
    %218 = vmatpush.msra.mxu0 %v161
    %219 = vmatmul.f32.gmra.mxu0 %v201
    %v220 = vpop.f32.mrf.mxu0
    %v221 = vadd.f32 %v195, %v220
    %222 = vdwg.mxu0
    %v223 = vld [vmem:[%s3] sm:$0x3]
    %v224 = vadd.f32 %v221, %v223
    %v225 = vmul.f32 %v224, 0.5
    %v226 = vtanh.pop %v225
    %v227 = vmul.f32 %v226, 0.5
    %v228 = vadd.f32 %v227, 0.5
    %v229 = vtanh.pop %v224
    %v230 = vmul.f32 %v228, %v105
    %232 = vrot.lane.b32.xlu0 %v229, 64
    %v233 = vpop.permute.xlu0 %232
    %v235 = vmul.f32 %v228, %v233
    %237 = vrot.lane.b32.xlu0 %v235, 32
    %v238 = vpop.permute.xlu0 %237
    %v240 = vadd.f32 %v230, %v238
    %v241 = vtanh.pop %v240
    %243 = vrot.lane.b32.xlu0 %v241, 64
    %v244 = vpop.permute.xlu0 %243
    %v246 = vmul.f32 %v228, %v244
    %v247 = vld [vmem:[#allocation9 + $0x60] sm:$0xff]
    %v248 = vld [vmem:[#allocation9 + $0x68] sm:$0xff]
    %v249 = vld [vmem:[#allocation9 + $0x70] sm:$0xff]
    %v250 = vld [vmem:[#allocation9 + $0x78] sm:$0xff]
    %v251 = vld [vmem:[#allocation11 + $0x1] sm:$0x1]
    %v252 = vperm.slane %v251, 0
    %254 = vrot.lane.b32.xlu0 %v246, 32
    %v255 = vpop.permute.xlu0 %254
    %v256 = vsel %vm173, %v255, 0
    %258 = vmatpush.msra.mxu0 0.0
    %259 = vmatpush.msra.mxu0 0.0
    %260 = vmatpush.msra.mxu0 0.0
    %261 = vmatpush.msra.mxu0 0.0
    %262 = vmatpush.msra.mxu0 0.0
    %263 = vmatpush.msra.mxu0 0.0
    %264 = vmatpush.msra.mxu0 0.0
    %265 = vmatpush.msra.mxu0 0.0
    %266 = vmatpush.msra.mxu0 0.0
    %267 = vmatpush.msra.mxu0 0.0
    %268 = vmatpush.msra.mxu0 0.0
    %269 = vmatpush.msra.mxu0 0.0
    %270 = vmatpush.msra.mxu0 %v250
    %271 = vmatpush.msra.mxu0 %v249
    %272 = vmatpush.msra.mxu0 %v248
    %273 = vmatpush.msra.mxu0 %v247
    %274 = vmatmul.f32.gmra.mxu0 %v256
    %v275 = vpop.f32.mrf.mxu0
    %v276 = vadd.f32 %v252, %v275
    %277 = vdwg.mxu0
    %278 = vst [vmem:[#allocation12] sm:$0x3] %v276
    %vm280 = vcmask 254976
    %281 = vst.msk [vmem:[#allocation2] sm:$0x3] %vm280, %v255
    %vm282 = vcmask 517376
    %283 = vst.msk [vmem:[#allocation2] sm:$0x3] %vm282, %v240
    // Predicated region
    $region50: #{tpu_custom_call.1} parent=1 // pred_check
      %p284 = pneg %p99
    $region51: #{tpu_custom_call.1} parent=1 // pred_check_branch
      %286 = sbr.rel (%p284) target = $region53
    $region52: #{tpu_custom_call.1} parent=1 // pred_region
      %v287 = vld [vmem:[#allocation2] sm:$0x3]
      %288 = vst [vmem:[#allocation13] sm:$0x3] %v287
    $region53: #{tpu_custom_call.1} parent=1 // pred_fallthru
      _
    // Predicated region
    $region54: #{tpu_custom_call.1} parent=1 // pred_check
      _
    $region55: #{tpu_custom_call.1} parent=1 // pred_check_branch
      %290 = sbr.rel (0) target = $region57
    $region56: #{tpu_custom_call.1} parent=1 // pred_region
      %292 = vsyncadd [#allocation5], 0
      %s294 = sshll.u32 [#allocation12], 4
      %s295 = int_to_ptr.vmem [resolvable:$true] %s294
      %s296 = sshll.u32 %s6, 4
      %s297 = int_to_ptr.hbm [resolvable:$true] %s296
      %299 = dma.vmem_to_hbm [thread:$0]  %s295, 32, %s297, [#allocation5]
    $region57: #{tpu_custom_call.1} parent=1 // pred_fallthru
      _
    // Predicated region
    $region58: #{tpu_custom_call.1} parent=1 // pred_check
      _
    $region59: #{tpu_custom_call.1} parent=1 // pred_check_branch
      %301 = sbr.rel (0) target = $region61
    $region60: #{tpu_custom_call.1} parent=1 // pred_region
      %303 = vsyncadd [#allocation14], 0
      %s305 = sshll.u32 [#allocation13], 4
      %s306 = int_to_ptr.vmem [resolvable:$true] %s305
      %s307 = sshll.u32 %s7, 4
      %s308 = int_to_ptr.hbm [resolvable:$true] %s307
      %310 = dma.vmem_to_hbm [thread:$0]  %s306, 32, %s308, [#allocation14]
    $region61: #{tpu_custom_call.1} parent=1 // pred_fallthru
      _
    // Predicated region
    $region62: #{tpu_custom_call.1} parent=1 // pred_check
      _
    $region63: #{tpu_custom_call.1} parent=1 // pred_check_branch
      %312 = sbr.rel (0) target = $region65
    $region64: #{tpu_custom_call.1} parent=1 // pred_region
      %314 = dma.done [#allocation5], 32
    $region65: #{tpu_custom_call.1} parent=1 // pred_fallthru
      _
    // Predicated region
    $region66: #{tpu_custom_call.1} parent=1 // pred_check
      _
    $region67: #{tpu_custom_call.1} parent=1 // pred_check_branch
      %316 = sbr.rel (0) target = $region69
    $region68: #{tpu_custom_call.1} parent=1 // pred_region
      %318 = dma.done [#allocation14], 32
    $region69: #{tpu_custom_call.1} parent=1 // pred_fallthru
      _
    %319 = vsyncpa [#allocation4], 1
    %320 = vsyncpa [#allocation7], 1
    %321 = vsyncpa [#allocation10], 1
    %322 = vsyncpa [#allocation5], 1
    %323 = vsyncpa [#allocation14], 1

</llo_original>
